<compile_context>
chip_gen: v7x
topology: tpu7x:2x2x1
jax: 0.10.0
libtpu: 0.0.40
codegen_flags: <defaults>
</compile_context>

<pallas_src>
import functools
import math

import jax
import jax.numpy as jnp
from jax.experimental import pallas as pl
from jax.experimental.pallas import tpu as pltpu


def _round_up(n: int, m: int) -> int:
    return ((n + m - 1) // m) * m


# ------------------------------ kernel ---------------------------------

def _fcnet_fused_kernel(x_ref, w1_ref, b1_ref, w2_ref, b2_ref, wh_ref, bh_ref,
                        out_ref):
    x = x_ref[...]
    # fused layer 1 (pi | v side by side) + ReLU
    h = jnp.dot(x, w1_ref[...], preferred_element_type=jnp.float32) + b1_ref[...]
    h = jnp.maximum(h, 0.0)
    # fused layer 2 (block-diagonal) + ReLU
    h = jnp.dot(h, w2_ref[...], preferred_element_type=jnp.float32) + b2_ref[...]
    h = jnp.maximum(h, 0.0)
    # fused heads: cols [0:num_outputs) = logits, col num_outputs = value
    out = jnp.dot(h, wh_ref[...], preferred_element_type=jnp.float32) + bh_ref[...]
    out_ref[...] = out.astype(out_ref.dtype)  # lane-dense [TM, 128] store


# ------------------------------ wrapper --------------------------------

def fcnet_forward(x, packed, *, num_outputs):
    """Fused FCNet forward.

    Args:
      x: [B, D_obs] float32 observations.
      packed: dict of fused/padded weights from pack_fcnet_params.
      num_outputs: number of policy logits (static).
    Returns:
      (logits [B, num_outputs], value [B]) — matches FCNet.forward /
      value_function (value is squeeze(1) of the v-head output).
    """
    B, D = x.shape
    Dp, H1f = packed["w1"].shape
    H2f, OUTF = packed["wh"].shape

    # Batch tile: 256 rows (one MXU pass on v6e/v7x) capped by the batch size;
    # small batches round up to a multiple of 8 sublanes.
    TM = 256 if B >= 256 else _round_up(B, 8)
    Bp = _round_up(B, TM)
    x_p = jnp.pad(x, ((0, Bp - B), (0, Dp - D)))  # zero-pad batch + lanes

    flops = 2 * Bp * (Dp * H1f + H1f * H2f + H2f * OUTF)
    bytes_accessed = 4 * (Bp * Dp + Dp * H1f + H1f * H2f + H2f * OUTF
                          + H1f + H2f + OUTF + Bp * OUTF)
    cost = pl.CostEstimate(flops=flops, transcendentals=0,
                           bytes_accessed=bytes_accessed)

    out = pl.pallas_call(
        _fcnet_fused_kernel,
        out_shape=jax.ShapeDtypeStruct((Bp, OUTF), jnp.float32),
        grid=(Bp // TM,),
        in_specs=[
            pl.BlockSpec((TM, Dp), lambda i: (i, 0)),     # x tile (pipelined)
            pl.BlockSpec((Dp, H1f), lambda i: (0, 0)),    # weights resident
            pl.BlockSpec((1, H1f), lambda i: (0, 0)),
            pl.BlockSpec((H1f, H2f), lambda i: (0, 0)),
            pl.BlockSpec((1, H2f), lambda i: (0, 0)),
            pl.BlockSpec((H2f, OUTF), lambda i: (0, 0)),
            pl.BlockSpec((1, OUTF), lambda i: (0, 0)),
        ],
        out_specs=pl.BlockSpec((TM, OUTF), lambda i: (i, 0)),
        compiler_params=pltpu.CompilerParams(
            dimension_semantics=("parallel",)),           # v7x: use both TCs
        cost_estimate=cost,
    )(x_p, packed["w1"], packed["b1"], packed["w2"], packed["b2"],
      packed["wh"], packed["bh"])

    logits = out[:B, :num_outputs]
    value = out[:B, num_outputs]
    return logits, value


# ----------------------- parameter initialization -----------------------

def _xavier_uniform(key, fan_in, fan_out):
    """Matches nn.init.xavier_uniform_ on an (out, in) Linear weight; we build
    the [in, out] transposed layout directly (same distribution)."""
    bound = math.sqrt(6.0 / (fan_in + fan_out))
    return jax.random.uniform(key, (fan_in, fan_out), jnp.float32, -bound, bound)


def make_fcnet_params(key, obs_dim, hiddens, num_outputs):
    assert len(hiddens) == 2, "this script hard-codes 2 hidden layers per tower"
    h1, h2 = hiddens
    keys = jax.random.split(key, 8)
    bias = lambda n: jnp.full((1, n), 0.01, jnp.float32)  # m.bias.data.fill_(0.01)
    return {
        # pi tower
        "pi_w1": _xavier_uniform(keys[0], obs_dim, h1), "pi_b1": bias(h1),
        "pi_w2": _xavier_uniform(keys[1], h1, h2),      "pi_b2": bias(h2),
        "pi_head_w": _xavier_uniform(keys[2], h2, num_outputs),
        "pi_head_b": bias(num_outputs),
        # v tower
        "v_w1": _xavier_uniform(keys[3], obs_dim, h1),  "v_b1": bias(h1),
        "v_w2": _xavier_uniform(keys[4], h1, h2),       "v_b2": bias(h2),
        "v_head_w": _xavier_uniform(keys[5], h2, 1),
        "v_head_b": bias(1),
    }


def pack_fcnet_params(p, obs_dim, hiddens, num_outputs):
    """Pack both towers into 3 block-diagonal, 128-lane-padded matrices."""
    h1, h2 = hiddens
    Dp = _round_up(max(obs_dim, 1), 128)
    H1f = _round_up(2 * h1, 128)
    H2f = _round_up(2 * h2, 128)
    OUTF = _round_up(num_outputs + 1, 128)

    # layer 1: pi cols [0:h1), v cols [h1:2h1), rest zero
    w1 = jnp.zeros((Dp, H1f), jnp.float32)
    w1 = w1.at[:obs_dim, :h1].set(p["pi_w1"]).at[:obs_dim, h1:2 * h1].set(p["v_w1"])
    b1 = jnp.zeros((1, H1f), jnp.float32)
    b1 = b1.at[:, :h1].set(p["pi_b1"]).at[:, h1:2 * h1].set(p["v_b1"])

    # layer 2: block-diagonal (padded rows/cols are all-zero, so ReLU'd
    # padding never leaks between towers)
    w2 = jnp.zeros((H1f, H2f), jnp.float32)
    w2 = w2.at[:h1, :h2].set(p["pi_w2"]).at[h1:2 * h1, h2:2 * h2].set(p["v_w2"])
    b2 = jnp.zeros((1, H2f), jnp.float32)
    b2 = b2.at[:, :h2].set(p["pi_b2"]).at[:, h2:2 * h2].set(p["v_b2"])

    # heads: logits in cols [0:num_outputs), value in col num_outputs
    wh = jnp.zeros((H2f, OUTF), jnp.float32)
    wh = wh.at[:h2, :num_outputs].set(p["pi_head_w"])
    wh = wh.at[h2:2 * h2, num_outputs:num_outputs + 1].set(p["v_head_w"])
    bh = jnp.zeros((1, OUTF), jnp.float32)
    bh = bh.at[:, :num_outputs].set(p["pi_head_b"])
    bh = bh.at[:, num_outputs:num_outputs + 1].set(p["v_head_b"])

    return {"w1": w1, "b1": b1, "w2": w2, "b2": b2, "wh": wh, "bh": bh}


# ----------------------------- reference ------------------------------

def fcnet_reference(x, p):
    relu = lambda a: jnp.maximum(a, 0.0)
    h_pi = relu(x @ p["pi_w1"] + p["pi_b1"])
    h_pi = relu(h_pi @ p["pi_w2"] + p["pi_b2"])
    logits = h_pi @ p["pi_head_w"] + p["pi_head_b"]
    h_v = relu(x @ p["v_w1"] + p["v_b1"])
    h_v = relu(h_v @ p["v_w2"] + p["v_b2"])
    value = (h_v @ p["v_head_w"] + p["v_head_b"])[:, 0]
    return logits, value


if __name__ == "__main__":
    # Small shapes consistent with the module: flat obs, two fc hiddens.
    B, OBS_DIM, HIDDENS, NUM_OUTPUTS = 8, 16, [32, 32], 4

    root = jax.random.PRNGKey(0)
    k_params, k_obs = jax.random.split(root)
    params = make_fcnet_params(k_params, OBS_DIM, HIDDENS, NUM_OUTPUTS)
    packed = pack_fcnet_params(params, OBS_DIM, HIDDENS, NUM_OUTPUTS)
    obs = jax.random.normal(k_obs, (B, OBS_DIM), jnp.float32)

    fwd = jax.jit(functools.partial(fcnet_forward, num_outputs=NUM_OUTPUTS))
    logits, value = fwd(obs, packed)
    jax.block_until_ready((logits, value))

    ref_logits, ref_value = fcnet_reference(obs, params)
    assert logits.shape == (B, NUM_OUTPUTS) and value.shape == (B,)
    assert jnp.allclose(logits, ref_logits, atol=1e-5, rtol=1e-5)
    assert jnp.allclose(value, ref_value, atol=1e-5, rtol=1e-5)

    print("KERNEL_OK")
</pallas_src>

<mosaic_0001>
module attributes {stable_mosaic.version = 11 : i64} {
  func.func @_fcnet_fused_kernel(%arg0: i32, %arg1: memref<8x128xf32, #tpu.memory_space<vmem>>, %arg2: memref<128x128xf32, #tpu.memory_space<vmem>>, %arg3: memref<1x128xf32, #tpu.memory_space<vmem>>, %arg4: memref<128x128xf32, #tpu.memory_space<vmem>>, %arg5: memref<1x128xf32, #tpu.memory_space<vmem>>, %arg6: memref<128x128xf32, #tpu.memory_space<vmem>>, %arg7: memref<1x128xf32, #tpu.memory_space<vmem>>, %arg8: memref<8x128xf32, #tpu.memory_space<vmem>>) attributes {dimension_semantics = [#tpu.dimension_semantics<parallel>], iteration_bounds = array<i64: 1>, scalar_prefetch = 0 : i64, scratch_operands = 0 : i64, tpu.core_type = #tpu.core_type<tc>, window_params = [{transform_indices = @transform_0, window_bounds = array<i64: 8, 128>}, {pipeline_mode = #tpu.pipeline_mode<synchronous>, transform_indices = @transform_1, window_bounds = array<i64: 128, 128>}, {pipeline_mode = #tpu.pipeline_mode<synchronous>, transform_indices = @transform_2, window_bounds = array<i64: 1, 128>}, {pipeline_mode = #tpu.pipeline_mode<synchronous>, transform_indices = @transform_3, window_bounds = array<i64: 128, 128>}, {pipeline_mode = #tpu.pipeline_mode<synchronous>, transform_indices = @transform_4, window_bounds = array<i64: 1, 128>}, {pipeline_mode = #tpu.pipeline_mode<synchronous>, transform_indices = @transform_5, window_bounds = array<i64: 128, 128>}, {pipeline_mode = #tpu.pipeline_mode<synchronous>, transform_indices = @transform_6, window_bounds = array<i64: 1, 128>}, {transform_indices = @transform_7, window_bounds = array<i64: 8, 128>}]} {
    %c0 = arith.constant 0 : index
    %c0_0 = arith.constant 0 : index
    %0 = vector.load %arg1[%c0, %c0_0] : memref<8x128xf32, #tpu.memory_space<vmem>>, vector<8x128xf32>
    %c0_1 = arith.constant 0 : index
    %c0_2 = arith.constant 0 : index
    %1 = vector.load %arg2[%c0_1, %c0_2] : memref<128x128xf32, #tpu.memory_space<vmem>>, vector<128x128xf32>
    %cst = arith.constant dense<0.000000e+00> : vector<8x128xf32>
    %2 = tpu.matmul %0, %1, %cst {dimension_numbers = #tpu.dot_dimension_numbers<[1], [0], [0], [1], [0, 0, 1, 1], [], []>} : vector<8x128xf32>, vector<128x128xf32>, vector<8x128xf32> -> vector<8x128xf32>
    %c0_3 = arith.constant 0 : index
    %c0_4 = arith.constant 0 : index
    %3 = vector.load %arg3[%c0_3, %c0_4] : memref<1x128xf32, #tpu.memory_space<vmem>>, vector<1x128xf32>
    %4 = vector.broadcast %3 : vector<1x128xf32> to vector<8x128xf32>
    %5 = arith.addf %2, %4 : vector<8x128xf32>
    %cst_5 = arith.constant 0.000000e+00 : f32
    %6 = vector.broadcast %cst_5 : f32 to vector<8x128xf32>
    %7 = arith.maximumf %5, %6 : vector<8x128xf32>
    %c0_6 = arith.constant 0 : index
    %c0_7 = arith.constant 0 : index
    %8 = vector.load %arg4[%c0_6, %c0_7] : memref<128x128xf32, #tpu.memory_space<vmem>>, vector<128x128xf32>
    %cst_8 = arith.constant dense<0.000000e+00> : vector<8x128xf32>
    %9 = tpu.matmul %7, %8, %cst_8 {dimension_numbers = #tpu.dot_dimension_numbers<[1], [0], [0], [1], [0, 0, 1, 1], [], []>} : vector<8x128xf32>, vector<128x128xf32>, vector<8x128xf32> -> vector<8x128xf32>
    %c0_9 = arith.constant 0 : index
    %c0_10 = arith.constant 0 : index
    %10 = vector.load %arg5[%c0_9, %c0_10] : memref<1x128xf32, #tpu.memory_space<vmem>>, vector<1x128xf32>
    %11 = vector.broadcast %10 : vector<1x128xf32> to vector<8x128xf32>
    %12 = arith.addf %9, %11 : vector<8x128xf32>
    %cst_11 = arith.constant 0.000000e+00 : f32
    %13 = vector.broadcast %cst_11 : f32 to vector<8x128xf32>
    %14 = arith.maximumf %12, %13 : vector<8x128xf32>
    %c0_12 = arith.constant 0 : index
    %c0_13 = arith.constant 0 : index
    %15 = vector.load %arg6[%c0_12, %c0_13] : memref<128x128xf32, #tpu.memory_space<vmem>>, vector<128x128xf32>
    %cst_14 = arith.constant dense<0.000000e+00> : vector<8x128xf32>
    %16 = tpu.matmul %14, %15, %cst_14 {dimension_numbers = #tpu.dot_dimension_numbers<[1], [0], [0], [1], [0, 0, 1, 1], [], []>} : vector<8x128xf32>, vector<128x128xf32>, vector<8x128xf32> -> vector<8x128xf32>
    %c0_15 = arith.constant 0 : index
    %c0_16 = arith.constant 0 : index
    %17 = vector.load %arg7[%c0_15, %c0_16] : memref<1x128xf32, #tpu.memory_space<vmem>>, vector<1x128xf32>
    %18 = vector.broadcast %17 : vector<1x128xf32> to vector<8x128xf32>
    %19 = arith.addf %16, %18 : vector<8x128xf32>
    %c0_17 = arith.constant 0 : index
    %c0_18 = arith.constant 0 : index
    %20 = vector.load %arg8[%c0_17, %c0_18] : memref<8x128xf32, #tpu.memory_space<vmem>>, vector<8x128xf32>
    tpu.vector_store %arg8[%c0_17, %c0_18], %19 {strides = array<i32>} : memref<8x128xf32, #tpu.memory_space<vmem>>, vector<8x128xf32>,
    return
  }
  func.func @transform_0(%arg0: i32) -> (i32, i32) {
    %c0_i32 = arith.constant 0 : i32
    %c0_i32_0 = arith.constant 0 : i32
    return %arg0, %c0_i32 : i32, i32
  }
  func.func @transform_1(%arg0: i32) -> (i32, i32) {
    %c0_i32 = arith.constant 0 : i32
    %c0_i32_0 = arith.constant 0 : i32
    %c0_i32_1 = arith.constant 0 : i32
    return %c0_i32, %c0_i32_0 : i32, i32
  }
  func.func @transform_2(%arg0: i32) -> (i32, i32) {
    %c0_i32 = arith.constant 0 : i32
    %c0_i32_0 = arith.constant 0 : i32
    %c0_i32_1 = arith.constant 0 : i32
    return %c0_i32, %c0_i32_0 : i32, i32
  }
  func.func @transform_3(%arg0: i32) -> (i32, i32) {
    %c0_i32 = arith.constant 0 : i32
    %c0_i32_0 = arith.constant 0 : i32
    %c0_i32_1 = arith.constant 0 : i32
    return %c0_i32, %c0_i32_0 : i32, i32
  }
  func.func @transform_4(%arg0: i32) -> (i32, i32) {
    %c0_i32 = arith.constant 0 : i32
    %c0_i32_0 = arith.constant 0 : i32
    %c0_i32_1 = arith.constant 0 : i32
    return %c0_i32, %c0_i32_0 : i32, i32
  }
  func.func @transform_5(%arg0: i32) -> (i32, i32) {
    %c0_i32 = arith.constant 0 : i32
    %c0_i32_0 = arith.constant 0 : i32
    %c0_i32_1 = arith.constant 0 : i32
    return %c0_i32, %c0_i32_0 : i32, i32
  }
  func.func @transform_6(%arg0: i32) -> (i32, i32) {
    %c0_i32 = arith.constant 0 : i32
    %c0_i32_0 = arith.constant 0 : i32
    %c0_i32_1 = arith.constant 0 : i32
    return %c0_i32, %c0_i32_0 : i32, i32
  }
  func.func @transform_7(%arg0: i32) -> (i32, i32) {
    %c0_i32 = arith.constant 0 : i32
    %c0_i32_0 = arith.constant 0 : i32
    return %arg0, %c0_i32 : i32, i32
  }
}

</mosaic_0001>

<llo_original>
// kernel: fcnet_forward.1
$region0: #{fcnet_forward.1}
  #allocation0 [shape = 'u32[]', space=smem, size = 0x4, offset = 0x4, fixed_abs, tag = 'smem constant byte address 0x4 - core index']
  #allocation1 [shape = 'u32[144,128]{1,0:T(1,128)}', space=vmem, size = 0x12000, scoped, tag = 'internal scratch']
  %s0 = inlined_call_operand.vmem [shape: f32[8,128], index: 0, kind: input, shape index: {}]
  %s1 = inlined_call_operand.hbm [shape: f32[128,128], index: 1, kind: input, shape index: {}]
  %s2 = inlined_call_operand.vmem [shape: f32[1,128], index: 2, kind: input, shape index: {}]
  %s3 = inlined_call_operand.hbm [shape: f32[128,128], index: 3, kind: input, shape index: {}]
  %s4 = inlined_call_operand.vmem [shape: f32[1,128], index: 4, kind: input, shape index: {}]
  %s5 = inlined_call_operand.hbm [shape: f32[128,128], index: 5, kind: input, shape index: {}]
  %s6 = inlined_call_operand.vmem [shape: f32[1,128], index: 6, kind: input, shape index: {}]
  %s7 = inlined_call_operand.vmem [shape: f32[8,128], index: 7, kind: output, shape index: {}]
  %s8 = sld [smem:[#allocation0]]
  $region50: #{fcnet_forward.1} parent=0
    _
  %s10 = ssub.s32 1, %s8
  %s11 = scalar_select 0, %s10, %s8
  $region1: #{fcnet_forward.1} parent=0
    #allocation2 [shape = 'u8[65536]{0}', space=vmem, size = 0x10000, scoped, tag = 'input window, operand 1, single buffered']
    #allocation3 [shape = 's32[1]{0}', space=sflag, size = 0x4, scoped, tag = 'scoped memory for fcnet_forward.1']
    #allocation4 [shape = 'u8[65536]{0}', space=vmem, size = 0x10000, scoped, tag = 'input window, operand 3, single buffered']
    #allocation5 [shape = 's32[1]{0}', space=sflag, size = 0x4, scoped, tag = 'scoped memory for fcnet_forward.1']
    #allocation6 [shape = 'u8[65536]{0}', space=vmem, size = 0x10000, scoped, tag = 'input window, operand 5, single buffered']
    %12 = vsyncpa [#allocation3], 0
    %13 = vsyncpa [#allocation5], 0
    // Predicated region
    $region2: #{fcnet_forward.1} parent=1 // pred_check
      _
    $region3: #{fcnet_forward.1} parent=1 // pred_check_branch
      %15 = sbr.rel (0) target = $region5
    $region4: #{fcnet_forward.1} parent=1 // pred_region
      _
    $region5: #{fcnet_forward.1} parent=1 // pred_fallthru
      _
    // Predicated region
    $region6: #{fcnet_forward.1} parent=1 // pred_check
      _
    $region7: #{fcnet_forward.1} parent=1 // pred_check_branch
      %17 = sbr.rel (0) target = $region9
    $region8: #{fcnet_forward.1} parent=1 // pred_region
      %s19 = ssub.s32 2048, 2048
      %20 = vsyncadd [#allocation3], %s19
      %s21 = sshll.u32 [#allocation2], 4
      %s22 = int_to_ptr.vmem [resolvable:$true] %s21
      %27 = dma.hbm_to_vmem [thread:$0]  %s1, 2048, %s22, [#allocation3], 128, 128, 8
    $region9: #{fcnet_forward.1} parent=1 // pred_fallthru
      _
    // Predicated region
    $region10: #{fcnet_forward.1} parent=1 // pred_check
      _
    $region11: #{fcnet_forward.1} parent=1 // pred_check_branch
      %29 = sbr.rel (0) target = $region13
    $region12: #{fcnet_forward.1} parent=1 // pred_region
      _
    $region13: #{fcnet_forward.1} parent=1 // pred_fallthru
      _
    // Predicated region
    $region14: #{fcnet_forward.1} parent=1 // pred_check
      _
    $region15: #{fcnet_forward.1} parent=1 // pred_check_branch
      %31 = sbr.rel (0) target = $region17
    $region16: #{fcnet_forward.1} parent=1 // pred_region
      %s33 = ssub.s32 2048, 2048
      %34 = vsyncadd [#allocation5], %s33
      %s35 = sshll.u32 [#allocation4], 4
      %s36 = int_to_ptr.vmem [resolvable:$true] %s35
      %41 = dma.hbm_to_vmem [thread:$0]  %s3, 2048, %s36, [#allocation5], 128, 128, 8
    $region17: #{fcnet_forward.1} parent=1 // pred_fallthru
      _
    // Predicated region
    $region18: #{fcnet_forward.1} parent=1 // pred_check
      _
    $region19: #{fcnet_forward.1} parent=1 // pred_check_branch
      %43 = sbr.rel (0) target = $region21
    $region20: #{fcnet_forward.1} parent=1 // pred_region
      _
    $region21: #{fcnet_forward.1} parent=1 // pred_fallthru
      _
    // Predicated region
    $region22: #{fcnet_forward.1} parent=1 // pred_check
      _
    $region23: #{fcnet_forward.1} parent=1 // pred_check_branch
      %45 = sbr.rel (0) target = $region25
    $region24: #{fcnet_forward.1} parent=1 // pred_region
      %s47 = ssub.s32 2048, 2048
      %48 = vsyncadd [#allocation5], %s47
      %s49 = sshll.u32 [#allocation6], 4
      %s50 = int_to_ptr.vmem [resolvable:$true] %s49
      %55 = dma.hbm_to_vmem [thread:$0]  %s5, 2048, %s50, [#allocation5], 128, 128, 8
    $region25: #{fcnet_forward.1} parent=1 // pred_fallthru
      _
    // Predicated region
    $region26: #{fcnet_forward.1} parent=1 // pred_check
      _
    $region27: #{fcnet_forward.1} parent=1 // pred_check_branch
      %57 = sbr.rel (0) target = $region29
    $region28: #{fcnet_forward.1} parent=1 // pred_region
      _
    $region29: #{fcnet_forward.1} parent=1 // pred_fallthru
      _
    // Predicated region
    $region30: #{fcnet_forward.1} parent=1 // pred_check
      _
    $region31: #{fcnet_forward.1} parent=1 // pred_check_branch
      %59 = sbr.rel (0) target = $region33
    $region32: #{fcnet_forward.1} parent=1 // pred_region
      %60 = dma.done [#allocation3], 2048
    $region33: #{fcnet_forward.1} parent=1 // pred_fallthru
      _
    // Predicated region
    $region34: #{fcnet_forward.1} parent=1 // pred_check
      _
    $region35: #{fcnet_forward.1} parent=1 // pred_check_branch
      %62 = sbr.rel (0) target = $region37
    $region36: #{fcnet_forward.1} parent=1 // pred_region
      %63 = dma.done [#allocation5], 2048
    $region37: #{fcnet_forward.1} parent=1 // pred_fallthru
      _
    // Predicated region
    $region38: #{fcnet_forward.1} parent=1 // pred_check
      _
    $region39: #{fcnet_forward.1} parent=1 // pred_check_branch
      %65 = sbr.rel (0) target = $region41
    $region40: #{fcnet_forward.1} parent=1 // pred_region
      %66 = dma.done [#allocation5], 2048
    $region41: #{fcnet_forward.1} parent=1 // pred_fallthru
      _
    %v67 = vld [vmem:[%s0] sm:$0xff]
    %v68 = vld [vmem:[#allocation2] sm:$0xff]
    %v69 = vld [vmem:[#allocation2 + $0x8] sm:$0xff]
    %v70 = vld [vmem:[#allocation2 + $0x10] sm:$0xff]
    %v71 = vld [vmem:[#allocation2 + $0x18] sm:$0xff]
    %v72 = vld [vmem:[#allocation2 + $0x20] sm:$0xff]
    %v73 = vld [vmem:[#allocation2 + $0x28] sm:$0xff]
    %v74 = vld [vmem:[#allocation2 + $0x30] sm:$0xff]
    %v75 = vld [vmem:[#allocation2 + $0x38] sm:$0xff]
    %v76 = vld [vmem:[#allocation2 + $0x40] sm:$0xff]
    %v77 = vld [vmem:[#allocation2 + $0x48] sm:$0xff]
    %v78 = vld [vmem:[#allocation2 + $0x50] sm:$0xff]
    %v79 = vld [vmem:[#allocation2 + $0x58] sm:$0xff]
    %v80 = vld [vmem:[#allocation2 + $0x60] sm:$0xff]
    %v81 = vld [vmem:[#allocation2 + $0x68] sm:$0xff]
    %v82 = vld [vmem:[#allocation2 + $0x70] sm:$0xff]
    %v83 = vld [vmem:[#allocation2 + $0x78] sm:$0xff]
    %v84 = vld [vmem:[%s2] sm:$0x1]
    %v86 = vlaneseq
    %v87 = vshrl.u32 %v86, 7
    %v88 = vsub.s32 0, %v87
    %v89 = vrot.slane %v84, %v88
    %91 = vmatprep.subr.mxu0 0.0
    %92 = vmatpush1.msra.mxu0 %v68
    %93 = vmatprep.subr.mxu0 0.0
    %94 = vmatpush1.msra.mxu0 %v69
    %95 = vmatprep.subr.mxu0 0.0
    %96 = vmatpush1.msra.mxu0 %v70
    %97 = vmatprep.subr.mxu0 0.0
    %98 = vmatpush1.msra.mxu0 %v71
    %99 = vmatprep.subr.mxu0 0.0
    %100 = vmatpush1.msra.mxu0 %v72
    %101 = vmatprep.subr.mxu0 0.0
    %102 = vmatpush1.msra.mxu0 %v73
    %103 = vmatprep.subr.mxu0 0.0
    %104 = vmatpush1.msra.mxu0 %v74
    %105 = vmatprep.subr.mxu0 0.0
    %106 = vmatpush1.msra.mxu0 %v75
    %107 = vmatprep.subr.mxu0 0.0
    %108 = vmatpush1.msra.mxu0 %v76
    %109 = vmatprep.subr.mxu0 0.0
    %110 = vmatpush1.msra.mxu0 %v77
    %111 = vmatprep.subr.mxu0 0.0
    %112 = vmatpush1.msra.mxu0 %v78
    %113 = vmatprep.subr.mxu0 0.0
    %114 = vmatpush1.msra.mxu0 %v79
    %115 = vmatprep.subr.mxu0 0.0
    %116 = vmatpush1.msra.mxu0 %v80
    %117 = vmatprep.subr.mxu0 0.0
    %118 = vmatpush1.msra.mxu0 %v81
    %119 = vmatprep.subr.mxu0 0.0
    %120 = vmatpush1.msra.mxu0 %v82
    %121 = vmatprep.subr.mxu0 0.0
    %122 = vmatpush1.msra.mxu0 %v83
    %123 = vmatprep.subr.mxu0 0.0
    %124 = vmatpush1.msra.mxu0 0.0
    %125 = vmatprep.subr.mxu0 0.0
    %126 = vmatpush1.msra.mxu0 0.0
    %127 = vmatprep.subr.mxu0 0.0
    %128 = vmatpush1.msra.mxu0 0.0
    %129 = vmatprep.subr.mxu0 0.0
    %130 = vmatpush1.msra.mxu0 0.0
    %131 = vmatprep.subr.mxu0 0.0
    %132 = vmatpush1.msra.mxu0 0.0
    %133 = vmatprep.subr.mxu0 0.0
    %134 = vmatpush1.msra.mxu0 0.0
    %135 = vmatprep.subr.mxu0 0.0
    %136 = vmatpush1.msra.mxu0 0.0
    %137 = vmatprep.subr.mxu0 0.0
    %138 = vmatpush1.msra.mxu0 0.0
    %139 = vmatprep.subr.mxu0 0.0
    %140 = vmatpush1.msra.mxu0 0.0
    %141 = vmatprep.subr.mxu0 0.0
    %142 = vmatpush1.msra.mxu0 0.0
    %143 = vmatprep.subr.mxu0 0.0
    %144 = vmatpush1.msra.mxu0 0.0
    %145 = vmatprep.subr.mxu0 0.0
    %146 = vmatpush1.msra.mxu0 0.0
    %147 = vmatprep.subr.mxu0 0.0
    %148 = vmatpush1.msra.mxu0 0.0
    %149 = vmatprep.subr.mxu0 0.0
    %150 = vmatpush1.msra.mxu0 0.0
    %151 = vmatprep.subr.mxu0 0.0
    %152 = vmatpush1.msra.mxu0 0.0
    %153 = vmatprep.subr.mxu0 0.0
    %154 = vmatpush1.msra.mxu0 0.0
    %155 = vmatprep.mubr.f32.mxu0 0.0
    %156 = vmatmul.mubr.f32.gmra.mrb[0].mxu0 %v67
    %v157 = vpop.f32.mrb[0].mxu0
    %v158 = vadd.f32 %v89, %v157
    %v159 = vpop.f32.mrb[0].mxu0
    %160 = vdwg.mxu0
    %v161 = vmax.f32 %v158, 0.0
    %v162 = vld [vmem:[#allocation4] sm:$0xff]
    %v163 = vld [vmem:[#allocation4 + $0x8] sm:$0xff]
    %v164 = vld [vmem:[#allocation4 + $0x10] sm:$0xff]
    %v165 = vld [vmem:[#allocation4 + $0x18] sm:$0xff]
    %v166 = vld [vmem:[#allocation4 + $0x20] sm:$0xff]
    %v167 = vld [vmem:[#allocation4 + $0x28] sm:$0xff]
    %v168 = vld [vmem:[#allocation4 + $0x30] sm:$0xff]
    %v169 = vld [vmem:[#allocation4 + $0x38] sm:$0xff]
    %v170 = vld [vmem:[#allocation4 + $0x40] sm:$0xff]
    %v171 = vld [vmem:[#allocation4 + $0x48] sm:$0xff]
    %v172 = vld [vmem:[#allocation4 + $0x50] sm:$0xff]
    %v173 = vld [vmem:[#allocation4 + $0x58] sm:$0xff]
    %v174 = vld [vmem:[#allocation4 + $0x60] sm:$0xff]
    %v175 = vld [vmem:[#allocation4 + $0x68] sm:$0xff]
    %v176 = vld [vmem:[#allocation4 + $0x70] sm:$0xff]
    %v177 = vld [vmem:[#allocation4 + $0x78] sm:$0xff]
    %v178 = vld [vmem:[%s4] sm:$0x1]
    %v180 = vlaneseq
    %v181 = vshrl.u32 %v180, 7
    %v182 = vsub.s32 0, %v181
    %v183 = vrot.slane %v178, %v182
    %185 = vmatprep.subr.mxu0 0.0
    %186 = vmatpush1.msra.mxu0 %v162
    %187 = vmatprep.subr.mxu0 0.0
    %188 = vmatpush1.msra.mxu0 %v163
    %189 = vmatprep.subr.mxu0 0.0
    %190 = vmatpush1.msra.mxu0 %v164
    %191 = vmatprep.subr.mxu0 0.0
    %192 = vmatpush1.msra.mxu0 %v165
    %193 = vmatprep.subr.mxu0 0.0
    %194 = vmatpush1.msra.mxu0 %v166
    %195 = vmatprep.subr.mxu0 0.0
    %196 = vmatpush1.msra.mxu0 %v167
    %197 = vmatprep.subr.mxu0 0.0
    %198 = vmatpush1.msra.mxu0 %v168
    %199 = vmatprep.subr.mxu0 0.0
    %200 = vmatpush1.msra.mxu0 %v169
    %201 = vmatprep.subr.mxu0 0.0
    %202 = vmatpush1.msra.mxu0 %v170
    %203 = vmatprep.subr.mxu0 0.0
    %204 = vmatpush1.msra.mxu0 %v171
    %205 = vmatprep.subr.mxu0 0.0
    %206 = vmatpush1.msra.mxu0 %v172
    %207 = vmatprep.subr.mxu0 0.0
    %208 = vmatpush1.msra.mxu0 %v173
    %209 = vmatprep.subr.mxu0 0.0
    %210 = vmatpush1.msra.mxu0 %v174
    %211 = vmatprep.subr.mxu0 0.0
    %212 = vmatpush1.msra.mxu0 %v175
    %213 = vmatprep.subr.mxu0 0.0
    %214 = vmatpush1.msra.mxu0 %v176
    %215 = vmatprep.subr.mxu0 0.0
    %216 = vmatpush1.msra.mxu0 %v177
    %217 = vmatprep.subr.mxu0 0.0
    %218 = vmatpush1.msra.mxu0 0.0
    %219 = vmatprep.subr.mxu0 0.0
    %220 = vmatpush1.msra.mxu0 0.0
    %221 = vmatprep.subr.mxu0 0.0
    %222 = vmatpush1.msra.mxu0 0.0
    %223 = vmatprep.subr.mxu0 0.0
    %224 = vmatpush1.msra.mxu0 0.0
    %225 = vmatprep.subr.mxu0 0.0
    %226 = vmatpush1.msra.mxu0 0.0
    %227 = vmatprep.subr.mxu0 0.0
    %228 = vmatpush1.msra.mxu0 0.0
    %229 = vmatprep.subr.mxu0 0.0
    %230 = vmatpush1.msra.mxu0 0.0
    %231 = vmatprep.subr.mxu0 0.0
    %232 = vmatpush1.msra.mxu0 0.0
    %233 = vmatprep.subr.mxu0 0.0
    %234 = vmatpush1.msra.mxu0 0.0
    %235 = vmatprep.subr.mxu0 0.0
    %236 = vmatpush1.msra.mxu0 0.0
    %237 = vmatprep.subr.mxu0 0.0
    %238 = vmatpush1.msra.mxu0 0.0
    %239 = vmatprep.subr.mxu0 0.0
    %240 = vmatpush1.msra.mxu0 0.0
    %241 = vmatprep.subr.mxu0 0.0
    %242 = vmatpush1.msra.mxu0 0.0
    %243 = vmatprep.subr.mxu0 0.0
    %244 = vmatpush1.msra.mxu0 0.0
    %245 = vmatprep.subr.mxu0 0.0
    %246 = vmatpush1.msra.mxu0 0.0
    %247 = vmatprep.subr.mxu0 0.0
    %248 = vmatpush1.msra.mxu0 0.0
    %249 = vmatprep.mubr.f32.mxu0 0.0
    %250 = vmatmul.mubr.f32.gmra.mrb[0].mxu0 %v161
    %v251 = vpop.f32.mrb[0].mxu0
    %v252 = vadd.f32 %v183, %v251
    %v253 = vpop.f32.mrb[0].mxu0
    %254 = vdwg.mxu0
    %v255 = vmax.f32 %v252, 0.0
    %v256 = vld [vmem:[#allocation6] sm:$0xff]
    %v257 = vld [vmem:[#allocation6 + $0x8] sm:$0xff]
    %v258 = vld [vmem:[#allocation6 + $0x10] sm:$0xff]
    %v259 = vld [vmem:[#allocation6 + $0x18] sm:$0xff]
    %v260 = vld [vmem:[#allocation6 + $0x20] sm:$0xff]
    %v261 = vld [vmem:[#allocation6 + $0x28] sm:$0xff]
    %v262 = vld [vmem:[#allocation6 + $0x30] sm:$0xff]
    %v263 = vld [vmem:[#allocation6 + $0x38] sm:$0xff]
    %v264 = vld [vmem:[#allocation6 + $0x40] sm:$0xff]
    %v265 = vld [vmem:[#allocation6 + $0x48] sm:$0xff]
    %v266 = vld [vmem:[#allocation6 + $0x50] sm:$0xff]
    %v267 = vld [vmem:[#allocation6 + $0x58] sm:$0xff]
    %v268 = vld [vmem:[#allocation6 + $0x60] sm:$0xff]
    %v269 = vld [vmem:[#allocation6 + $0x68] sm:$0xff]
    %v270 = vld [vmem:[#allocation6 + $0x70] sm:$0xff]
    %v271 = vld [vmem:[#allocation6 + $0x78] sm:$0xff]
    %v272 = vld [vmem:[%s6] sm:$0x1]
    %v274 = vlaneseq
    %v275 = vshrl.u32 %v274, 7
    %v276 = vsub.s32 0, %v275
    %v277 = vrot.slane %v272, %v276
    %279 = vmatprep.subr.mxu0 0.0
    %280 = vmatpush1.msra.mxu0 %v256
    %281 = vmatprep.subr.mxu0 0.0
    %282 = vmatpush1.msra.mxu0 %v257
    %283 = vmatprep.subr.mxu0 0.0
    %284 = vmatpush1.msra.mxu0 %v258
    %285 = vmatprep.subr.mxu0 0.0
    %286 = vmatpush1.msra.mxu0 %v259
    %287 = vmatprep.subr.mxu0 0.0
    %288 = vmatpush1.msra.mxu0 %v260
    %289 = vmatprep.subr.mxu0 0.0
    %290 = vmatpush1.msra.mxu0 %v261
    %291 = vmatprep.subr.mxu0 0.0
    %292 = vmatpush1.msra.mxu0 %v262
    %293 = vmatprep.subr.mxu0 0.0
    %294 = vmatpush1.msra.mxu0 %v263
    %295 = vmatprep.subr.mxu0 0.0
    %296 = vmatpush1.msra.mxu0 %v264
    %297 = vmatprep.subr.mxu0 0.0
    %298 = vmatpush1.msra.mxu0 %v265
    %299 = vmatprep.subr.mxu0 0.0
    %300 = vmatpush1.msra.mxu0 %v266
    %301 = vmatprep.subr.mxu0 0.0
    %302 = vmatpush1.msra.mxu0 %v267
    %303 = vmatprep.subr.mxu0 0.0
    %304 = vmatpush1.msra.mxu0 %v268
    %305 = vmatprep.subr.mxu0 0.0
    %306 = vmatpush1.msra.mxu0 %v269
    %307 = vmatprep.subr.mxu0 0.0
    %308 = vmatpush1.msra.mxu0 %v270
    %309 = vmatprep.subr.mxu0 0.0
    %310 = vmatpush1.msra.mxu0 %v271
    %311 = vmatprep.subr.mxu0 0.0
    %312 = vmatpush1.msra.mxu0 0.0
    %313 = vmatprep.subr.mxu0 0.0
    %314 = vmatpush1.msra.mxu0 0.0
    %315 = vmatprep.subr.mxu0 0.0
    %316 = vmatpush1.msra.mxu0 0.0
    %317 = vmatprep.subr.mxu0 0.0
    %318 = vmatpush1.msra.mxu0 0.0
    %319 = vmatprep.subr.mxu0 0.0
    %320 = vmatpush1.msra.mxu0 0.0
    %321 = vmatprep.subr.mxu0 0.0
    %322 = vmatpush1.msra.mxu0 0.0
    %323 = vmatprep.subr.mxu0 0.0
    %324 = vmatpush1.msra.mxu0 0.0
    %325 = vmatprep.subr.mxu0 0.0
    %326 = vmatpush1.msra.mxu0 0.0
    %327 = vmatprep.subr.mxu0 0.0
    %328 = vmatpush1.msra.mxu0 0.0
    %329 = vmatprep.subr.mxu0 0.0
    %330 = vmatpush1.msra.mxu0 0.0
    %331 = vmatprep.subr.mxu0 0.0
    %332 = vmatpush1.msra.mxu0 0.0
    %333 = vmatprep.subr.mxu0 0.0
    %334 = vmatpush1.msra.mxu0 0.0
    %335 = vmatprep.subr.mxu0 0.0
    %336 = vmatpush1.msra.mxu0 0.0
    %337 = vmatprep.subr.mxu0 0.0
    %338 = vmatpush1.msra.mxu0 0.0
    %339 = vmatprep.subr.mxu0 0.0
    %340 = vmatpush1.msra.mxu0 0.0
    %341 = vmatprep.subr.mxu0 0.0
    %342 = vmatpush1.msra.mxu0 0.0
    %343 = vmatprep.mubr.f32.mxu0 0.0
    %344 = vmatmul.mubr.f32.gmra.mrb[0].mxu0 %v255
    %v345 = vpop.f32.mrb[0].mxu0
    %v346 = vadd.f32 %v277, %v345
    %v347 = vpop.f32.mrb[0].mxu0
    %348 = vdwg.mxu0
    %349 = vst [vmem:[%s7] sm:$0xff] %v346
    // Predicated region
    $region42: #{fcnet_forward.1} parent=1 // pred_check
      _
    $region43: #{fcnet_forward.1} parent=1 // pred_check_branch
      %351 = sbr.rel (0) target = $region45
    $region44: #{fcnet_forward.1} parent=1 // pred_region
      _
    $region45: #{fcnet_forward.1} parent=1 // pred_fallthru
      _
    // Predicated region
    $region46: #{fcnet_forward.1} parent=1 // pred_check
      _
    $region47: #{fcnet_forward.1} parent=1 // pred_check_branch
      %353 = sbr.rel (0) target = $region49
    $region48: #{fcnet_forward.1} parent=1 // pred_region
      _
    $region49: #{fcnet_forward.1} parent=1 // pred_fallthru
      _
    %354 = vsyncpa [#allocation3], 1
    %355 = vsyncpa [#allocation5], 1

</llo_original>
